<compile_context>
chip_gen: v6e
topology: v6e:2x2x1
jax: 0.10.0
libtpu: 0.0.40
codegen_flags: <defaults>
</compile_context>

<pallas_src>
import jax
import jax.numpy as jnp
from jax import lax
from jax.experimental import pallas as pl
from jax.experimental.pallas import tpu as pltpu

_LANE = 128
_SUBLANE = 8


def _msgnorm_kernel(scale_ref, x_ref, msg_ref, out_ref):
    # scale_ref: SMEM scalar (1,); x_ref/msg_ref/out_ref: VMEM tiles (tile_n, D_pad)

    # Compute the x row-norm first so the f32 upcast of x is dead before the
    # final full-tile multiply (keeps only one big f32 temp live at a time).
    x = x_ref[...].astype(jnp.float32)
    x_norm = jnp.sqrt(jnp.sum(x * x, axis=1, keepdims=True))        # (tile_n, 1)

    m = msg_ref[...].astype(jnp.float32)
    m_sq = jnp.sum(m * m, axis=1, keepdims=True)                    # (tile_n, 1)
    # rsqrt goes to the EUP (its own VLIW slot). Clamp the *squared* sum at
    # 1e-24 == (F.normalize eps 1e-12)^2 to preserve the original behavior.
    inv_norm = lax.rsqrt(jnp.maximum(m_sq, 1e-24))

    factor = x_norm * inv_norm * scale_ref[0]                       # (tile_n, 1) f32
    out_ref[...] = (m * factor).astype(out_ref.dtype)               # one full-tile mul


def _round_up(v, m):
    return ((v + m - 1) // m) * m


def _choose_tile_n(n_pad, d_pad, itemsize, budget_bytes=8 << 20, max_tile=2048):
    # Pipeline footprint per grid step: 3 arrays (x, msg, out) x 2 buffers.
    per_row = 3 * 2 * d_pad * itemsize
    tile = budget_bytes // max(per_row, 1)
    tile = max(_SUBLANE, min(tile, max_tile, n_pad))
    tile = (tile // _SUBLANE) * _SUBLANE
    return max(tile, _SUBLANE)


def msg_norm(x, msg, msg_scale, p=2):
    """MsgNorm forward. Only p=2 (the module default) is implemented."""
    assert p == 2  # TODO(synk): general-p norm not implemented (module default p=2)
    N, D = x.shape
    assert msg.shape == (N, D)

    # Lane-dense feature dim: pad D to a multiple of 128 so stores are
    # unmasked full-lane vst's (zeros do not change the row L2 norms).
    D_pad = _round_up(D, _LANE)

    itemsize = jnp.dtype(msg.dtype).itemsize
    tile_n = _choose_tile_n(_round_up(N, _SUBLANE), D_pad, itemsize)
    # Pad rows to a multiple of the tile (zero rows are harmless: factor * 0 = 0).
    N_pad = _round_up(N, tile_n)

    pad_x, pad_m = x, msg
    if (N_pad, D_pad) != (N, D):
        pad_x = jnp.pad(x, ((0, N_pad - N), (0, D_pad - D)))
        pad_m = jnp.pad(msg, ((0, N_pad - N), (0, D_pad - D)))

    scale = jnp.asarray(msg_scale, dtype=jnp.float32).reshape((1,))

    grid = (N_pad // tile_n,)
    out = pl.pallas_call(
        _msgnorm_kernel,
        out_shape=jax.ShapeDtypeStruct((N_pad, D_pad), msg.dtype),
        grid_spec=pltpu.PrefetchScalarGridSpec(
            num_scalar_prefetch=0,
            grid=grid,
            in_specs=[
                pl.BlockSpec(memory_space=pltpu.MemorySpace.SMEM),      # msg_scale
                pl.BlockSpec((tile_n, D_pad), lambda i: (i, 0)),        # x
                pl.BlockSpec((tile_n, D_pad), lambda i: (i, 0)),        # msg
            ],
            out_specs=pl.BlockSpec((tile_n, D_pad), lambda i: (i, 0)),
        ),
        compiler_params=pltpu.CompilerParams(
            dimension_semantics=("parallel",),   # megacore-shardable on v7x
            vmem_limit_bytes=48 * 1024 * 1024,   # < 64 MiB physical on v7x
        ),
    )(scale, pad_x, pad_m)

    if (N_pad, D_pad) != (N, D):
        out = out[:N, :D]
    return out


if __name__ == "__main__":
    key = jax.random.PRNGKey(0)
    kx, km = jax.random.split(key)

    N, D = 16, 32  # small synthetic graph: 16 nodes, 32 features
    x = jax.random.normal(kx, (N, D), dtype=jnp.float32)
    msg = jax.random.normal(km, (N, D), dtype=jnp.float32)

    # Deterministic parameter init, same as torch.nn.Parameter(torch.Tensor([1.0]))
    msg_scale = jnp.array([1.0], dtype=jnp.float32)

    out = msg_norm(x, msg, msg_scale)
    out = jax.block_until_ready(out)

    # Reference check in plain JAX (mirrors the PyTorch forward).
    msg_n = msg / jnp.maximum(
        jnp.linalg.norm(msg, ord=2, axis=1, keepdims=True), 1e-12
    )
    x_n = jnp.linalg.norm(x, ord=2, axis=1, keepdims=True)
    ref = msg_n * x_n * msg_scale[0]
    assert out.shape == (N, D)
    assert jnp.allclose(out, ref, atol=1e-5, rtol=1e-5)

    print("KERNEL_OK")
</pallas_src>

<mosaic_0001>
module attributes {stable_mosaic.version = 11 : i64} {
  func.func @_msgnorm_kernel(%arg0: i32, %arg1: memref<1xf32, #tpu.memory_space<smem>>, %arg2: memref<16x128xf32, #tpu.memory_space<vmem>>, %arg3: memref<16x128xf32, #tpu.memory_space<vmem>>, %arg4: memref<16x128xf32, #tpu.memory_space<vmem>>) attributes {dimension_semantics = [#tpu.dimension_semantics<parallel>], iteration_bounds = array<i64: 1>, scalar_prefetch = 0 : i64, scratch_operands = 0 : i64, tpu.core_type = #tpu.core_type<tc>, window_params = [{transform_indices = @transform_0, window_bounds = array<i64: 1>}, {transform_indices = @transform_1, window_bounds = array<i64: 16, 128>}, {transform_indices = @transform_2, window_bounds = array<i64: 16, 128>}, {transform_indices = @transform_3, window_bounds = array<i64: 16, 128>}]} {
    %c0 = arith.constant 0 : index
    %c0_0 = arith.constant 0 : index
    %0 = vector.load %arg2[%c0, %c0_0] : memref<16x128xf32, #tpu.memory_space<vmem>>, vector<16x128xf32>
    %1 = arith.mulf %0, %0 : vector<16x128xf32>
    %cst = arith.constant dense<0.000000e+00> : vector<16xf32>
    %2 = vector.multi_reduction <add>, %1, %cst [1] : vector<16x128xf32> to vector<16xf32>
    %3 = vector.shape_cast %2 : vector<16xf32> to vector<16x1xf32>
    %4 = math.sqrt %3 : vector<16x1xf32>
    %c0_1 = arith.constant 0 : index
    %c0_2 = arith.constant 0 : index
    %5 = vector.load %arg3[%c0_1, %c0_2] : memref<16x128xf32, #tpu.memory_space<vmem>>, vector<16x128xf32>
    %6 = arith.mulf %5, %5 : vector<16x128xf32>
    %cst_3 = arith.constant dense<0.000000e+00> : vector<16xf32>
    %7 = vector.multi_reduction <add>, %6, %cst_3 [1] : vector<16x128xf32> to vector<16xf32>
    %8 = vector.shape_cast %7 : vector<16xf32> to vector<16x1xf32>
    %cst_4 = arith.constant 1.000000e-24 : f32
    %9 = vector.broadcast %cst_4 : f32 to vector<16x1xf32>
    %10 = arith.maximumf %8, %9 : vector<16x1xf32>
    %11 = math.rsqrt %10 : vector<16x1xf32>
    %12 = arith.mulf %4, %11 : vector<16x1xf32>
    %c0_5 = arith.constant 0 : index
    %13 = memref.load %arg1[%c0_5] : memref<1xf32, #tpu.memory_space<smem>>
    %14 = vector.broadcast %13 : f32 to vector<16x1xf32>
    %15 = arith.mulf %12, %14 : vector<16x1xf32>
    %16 = vector.broadcast %15 : vector<16x1xf32> to vector<16x128xf32>
    %17 = arith.mulf %5, %16 : vector<16x128xf32>
    %c0_6 = arith.constant 0 : index
    %c0_7 = arith.constant 0 : index
    %18 = vector.load %arg4[%c0_6, %c0_7] : memref<16x128xf32, #tpu.memory_space<vmem>>, vector<16x128xf32>
    tpu.vector_store %arg4[%c0_6, %c0_7], %17 {strides = array<i32>} : memref<16x128xf32, #tpu.memory_space<vmem>>, vector<16x128xf32>,
    return
  }
  func.func @transform_0(%arg0: i32) -> i32 {
    %c0_i32 = arith.constant 0 : i32
    %c0_i32_0 = arith.constant 0 : i32
    return %c0_i32 : i32
  }
  func.func @transform_1(%arg0: i32) -> (i32, i32) {
    %c0_i32 = arith.constant 0 : i32
    %c0_i32_0 = arith.constant 0 : i32
    return %arg0, %c0_i32 : i32, i32
  }
  func.func @transform_2(%arg0: i32) -> (i32, i32) {
    %c0_i32 = arith.constant 0 : i32
    %c0_i32_0 = arith.constant 0 : i32
    return %arg0, %c0_i32 : i32, i32
  }
  func.func @transform_3(%arg0: i32) -> (i32, i32) {
    %c0_i32 = arith.constant 0 : i32
    %c0_i32_0 = arith.constant 0 : i32
    return %arg0, %c0_i32 : i32, i32
  }
}

</mosaic_0001>

<llo_original>
// kernel: tpu_custom_call.1
$region0: #{tpu_custom_call.1}
  #allocation0 [shape = 'u32[]', space=smem, size = 0x4, offset = 0x4, fixed_abs, tag = 'smem constant byte address 0x4 - core index']
  #allocation1 [shape = 'u32[144,128]{1,0:T(1,128)}', space=vmem, size = 0x12000, scoped, tag = 'internal scratch']
  #allocation2 [shape = 'f32[1]{0:T(128)S(6)}', space=smem, size = 0x200, scoped, tag = 'scoped memory for tpu_custom_call.1']
  %s0 = inlined_call_operand.<no memory space> [shape: f32[1], index: 0, kind: input, shape index: {}]
  %s1 = inlined_call_operand.hbm [shape: f32[16,128], index: 1, kind: input, shape index: {}]
  %s2 = inlined_call_operand.hbm [shape: f32[16,128], index: 2, kind: input, shape index: {}]
  %s3 = inlined_call_operand.hbm [shape: f32[16,128], index: 3, kind: output, shape index: {}]
  %s4 = sld [smem:[#allocation0]]
  $region30: #{tpu_custom_call.1} parent=0
    _
  %s6 = ssub.s32 1, %s4
  %s7 = scalar_select 0, %s6, %s4
  %8 = sst [smem:[#allocation2]] %s0
  $region1: #{tpu_custom_call.1} parent=0
    #allocation3 [shape = 'u8[8192]{0}', space=vmem, size = 0x2000, scoped, tag = 'input window, operand 1, single buffered']
    #allocation4 [shape = 's32[1]{0}', space=sflag, size = 0x4, scoped, tag = 'scoped memory for tpu_custom_call.1']
    #allocation5 [shape = 's32[1]{0}', space=sflag, size = 0x4, scoped, tag = 'scoped memory for tpu_custom_call.1']
    #allocation6 [shape = 'u8[8192]{0}', space=vmem, size = 0x2000, scoped, tag = 'input window, operand 2, single buffered']
    #allocation7 [shape = 's32[1]{0}', space=sflag, size = 0x4, scoped, tag = 'scoped memory for tpu_custom_call.1']
    #allocation8 [shape = 'u8[8192]{0}', space=vmem, size = 0x2000, scoped, tag = 'output window, operand 0, single buffered']
    %9 = vsyncpa [#allocation4], 0
    %10 = vsyncpa [#allocation7], 0
    %11 = vsyncpa [#allocation5], 0
    // Predicated region
    $region2: #{tpu_custom_call.1} parent=1 // pred_check
      _
    $region3: #{tpu_custom_call.1} parent=1 // pred_check_branch
      %13 = sbr.rel (0) target = $region5
    $region4: #{tpu_custom_call.1} parent=1 // pred_region
      _
    $region5: #{tpu_custom_call.1} parent=1 // pred_fallthru
      _
    // Predicated region
    $region6: #{tpu_custom_call.1} parent=1 // pred_check
      _
    $region7: #{tpu_custom_call.1} parent=1 // pred_check_branch
      %15 = sbr.rel (0) target = $region9
    $region8: #{tpu_custom_call.1} parent=1 // pred_region
      %s17 = ssub.s32 256, 256
      %18 = vsyncadd [#allocation4], %s17
      %s19 = sshll.u32 [#allocation3], 4
      %s20 = int_to_ptr.vmem [resolvable:$true] %s19
      %25 = dma.hbm_to_vmem [thread:$0]  %s1, 256, %s20, [#allocation4], 128, 128, 8
    $region9: #{tpu_custom_call.1} parent=1 // pred_fallthru
      _
    // Predicated region
    $region10: #{tpu_custom_call.1} parent=1 // pred_check
      _
    $region11: #{tpu_custom_call.1} parent=1 // pred_check_branch
      %27 = sbr.rel (0) target = $region13
    $region12: #{tpu_custom_call.1} parent=1 // pred_region
      %s29 = ssub.s32 256, 256
      %30 = vsyncadd [#allocation7], %s29
      %s31 = sshll.u32 [#allocation6], 4
      %s32 = int_to_ptr.vmem [resolvable:$true] %s31
      %37 = dma.hbm_to_vmem [thread:$0]  %s2, 256, %s32, [#allocation7], 128, 128, 8
    $region13: #{tpu_custom_call.1} parent=1 // pred_fallthru
      _
    // Predicated region
    $region14: #{tpu_custom_call.1} parent=1 // pred_check
      _
    $region15: #{tpu_custom_call.1} parent=1 // pred_check_branch
      %39 = sbr.rel (0) target = $region17
    $region16: #{tpu_custom_call.1} parent=1 // pred_region
      %40 = dma.done [#allocation4], 256
    $region17: #{tpu_custom_call.1} parent=1 // pred_fallthru
      _
    // Predicated region
    $region18: #{tpu_custom_call.1} parent=1 // pred_check
      _
    $region19: #{tpu_custom_call.1} parent=1 // pred_check_branch
      %42 = sbr.rel (0) target = $region21
    $region20: #{tpu_custom_call.1} parent=1 // pred_region
      %43 = dma.done [#allocation7], 256
    $region21: #{tpu_custom_call.1} parent=1 // pred_fallthru
      _
    %v44 = vld [vmem:[#allocation3] sm:$0xff]
    %v45 = vld [vmem:[#allocation3 + $0x8] sm:$0xff]
    %v46 = vmul.f32 %v44, %v44
    %v47 = vmul.f32 %v45, %v45
    %48 = vadd.xlane.f32.xlu0 %v46
    %v49 = vpop.xlane.xlu0 %48
    %50 = vadd.xlane.f32.xlu0 %v47
    %v51 = vpop.xlane.xlu0 %50
    %v52 = vrsqrt.pop %v49
    %v53 = vmul.f32 %v49, %v52
    %vm54 = vcmp.eq.f32.partialorder %v49, inf
    %v55 = vsel %vm54, %v49, %v53
    %vm56 = vcmp.eq.f32.partialorder %v49, 0.0
    %v57 = vand.u32 %v49, 2147483648
    %v58 = vsel %vm56, %v57, %v55
    %v59 = vrsqrt.pop %v51
    %v60 = vmul.f32 %v51, %v59
    %vm61 = vcmp.eq.f32.partialorder %v51, inf
    %v62 = vsel %vm61, %v51, %v60
    %vm63 = vcmp.eq.f32.partialorder %v51, 0.0
    %v64 = vand.u32 %v51, 2147483648
    %v65 = vsel %vm63, %v64, %v62
    %v66 = vld [vmem:[#allocation6] sm:$0xff]
    %v67 = vld [vmem:[#allocation6 + $0x8] sm:$0xff]
    %v68 = vmul.f32 %v66, %v66
    %v69 = vmul.f32 %v67, %v67
    %70 = vadd.xlane.f32.xlu0 %v68
    %v71 = vpop.xlane.xlu0 %70
    %72 = vadd.xlane.f32.xlu0 %v69
    %v73 = vpop.xlane.xlu0 %72
    %v74 = vmax.f32 %v71, 1e-24
    %v75 = vmax.f32 %v73, 1e-24
    %v76 = vrsqrt.pop %v74
    %v77 = vrsqrt.pop %v75
    %v78 = vmul.f32 %v58, %v76
    %v79 = vmul.f32 %v65, %v77
    %s80 = sld [smem:[#allocation2]]
    %v81 = vstv %s80
    %v82 = vmul.f32 %v78, %v81
    %v83 = vmul.f32 %v79, %v81
    %v84 = vmul.f32 %v66, %v82
    %v85 = vmul.f32 %v67, %v83
    %86 = vst [vmem:[#allocation8] sm:$0xff] %v84
    %87 = vst [vmem:[#allocation8 + $0x8] sm:$0xff] %v85
    // Predicated region
    $region22: #{tpu_custom_call.1} parent=1 // pred_check
      _
    $region23: #{tpu_custom_call.1} parent=1 // pred_check_branch
      %89 = sbr.rel (0) target = $region25
    $region24: #{tpu_custom_call.1} parent=1 // pred_region
      %s91 = ssub.s32 256, 256
      %92 = vsyncadd [#allocation5], %s91
      %s93 = sshll.u32 [#allocation8], 4
      %s94 = int_to_ptr.vmem [resolvable:$true] %s93
      %99 = dma.vmem_to_hbm [thread:$0]  %s94, 256, %s3, [#allocation5], 128, 128, 8
    $region25: #{tpu_custom_call.1} parent=1 // pred_fallthru
      _
    // Predicated region
    $region26: #{tpu_custom_call.1} parent=1 // pred_check
      _
    $region27: #{tpu_custom_call.1} parent=1 // pred_check_branch
      %101 = sbr.rel (0) target = $region29
    $region28: #{tpu_custom_call.1} parent=1 // pred_region
      %102 = dma.done [#allocation5], 256
    $region29: #{tpu_custom_call.1} parent=1 // pred_fallthru
      _
    %103 = vsyncpa [#allocation4], 1
    %104 = vsyncpa [#allocation7], 1
    %105 = vsyncpa [#allocation5], 1

</llo_original>
